<compile_context>
chip_gen: v7x
topology: tpu7x:2x2x1
jax: 0.10.0
libtpu: 0.0.40
codegen_flags: <defaults>
</compile_context>

<pallas_src>
import functools

import jax
import jax.numpy as jnp
from jax.experimental import pallas as pl
from jax.experimental.pallas import tpu as pltpu

LANE = 128          # vreg lane width; all weight slabs use 128 lanes
_BIAS_ROWS = 8      # bias block (sublane-aligned): row 0 = b1, 1 = b2, 2 = b3


def _round_up(n, m):
    return ((n + m - 1) // m) * m


def _num_tensorcores():
    """Best-effort TensorCores-per-chip (2 on v7x, 1 on v5e/v6e). Never raises."""
    try:
        d = jax.devices()[0]
        nc = getattr(d, "num_cores", None)
        if nc:
            return max(1, int(nc))
        return 2 if "7" in str(getattr(d, "device_kind", "")) else 1
    except Exception:
        return 1


def _qnet_kernel(x_ref, p_ref, o_ref, *, in_rows, hid_rows, w2_off, w3_off,
                 b_off, out_lanes):
    x = x_ref[...]                                    # [bm, in_rows]
    w1 = p_ref[0:in_rows, :]                          # [in_rows, 128]
    w2 = p_ref[w2_off:w2_off + hid_rows, :]           # [hid_rows, 128]
    w3 = p_ref[w3_off:w3_off + hid_rows, :]           # [hid_rows, 128]
    bias = p_ref[b_off:b_off + _BIAS_ROWS, :]         # [8, 128]
    b1 = bias[0:1, :]
    b2 = bias[1:2, :]
    b3 = bias[2:3, :]

    # layer 1: relu(x @ W1 + b1) -> [bm, 128]; lanes >= hidden_size are exactly 0
    h1 = jnp.dot(x, w1, preferred_element_type=jnp.float32)
    h1 = jnp.maximum(h1 + b1, 0.0)
    # layer 2: relu(h1 @ W2 + b2); contract only the hid_rows useful lanes
    h2 = jnp.dot(h1[:, :hid_rows], w2, preferred_element_type=jnp.float32)
    h2 = jnp.maximum(h2 + b2, 0.0)
    # layer 3: h2 @ W3 + b3 (no activation); store only the useful lanes
    out = jnp.dot(h2[:, :hid_rows], w3, preferred_element_type=jnp.float32) + b3
    o_ref[...] = out[:, :out_lanes].astype(o_ref.dtype)


def pack_params(params, input_size, hidden_size, output_size):
    """Pack w1/b1/w2/b2/w3/b3 into one zero-padded f32 slab of shape
    [round_up(in,8) + 2*round_up(hidden,8) + 8, 128]."""
    assert max(input_size, hidden_size, output_size) <= LANE, (
        "this packing assumes every layer width fits in one 128-lane block")
    in_rows = _round_up(input_size, 8)
    hid_rows = _round_up(hidden_size, 8)
    w2_off = in_rows
    w3_off = in_rows + hid_rows
    b_off = in_rows + 2 * hid_rows
    slab = jnp.zeros((b_off + _BIAS_ROWS, LANE), jnp.float32)
    slab = slab.at[:input_size, :hidden_size].set(params["w1"])
    slab = slab.at[w2_off:w2_off + hidden_size, :hidden_size].set(params["w2"])
    slab = slab.at[w3_off:w3_off + hidden_size, :output_size].set(params["w3"])
    slab = slab.at[b_off + 0, :hidden_size].set(params["b1"][0])
    slab = slab.at[b_off + 1, :hidden_size].set(params["b2"][0])
    slab = slab.at[b_off + 2, :output_size].set(params["b3"][0])
    return slab


@functools.partial(jax.jit, static_argnames=("output_size", "block_b"))
def linear_qnet_forward(x, param_slab, *, output_size, block_b=4096):
    """Fused 3-layer MLP forward.  x: [B, input_size] f32 -> [B, output_size]."""
    B, F = x.shape
    assert F <= LANE and output_size <= LANE
    in_rows = _round_up(F, 8)
    slab_rows = param_slab.shape[0]
    hid_rows = (slab_rows - in_rows - _BIAS_ROWS) // 2
    assert slab_rows == in_rows + 2 * hid_rows + _BIAS_ROWS, (
        "param slab does not match x's feature size")
    out_lanes = _round_up(output_size, 8)

    # Batch tiling: as few grid steps as possible (one per TensorCore), with a
    # cap so huge batches still fit comfortably in scoped VMEM on every gen.
    block_b = _round_up(max(block_b, 8), 8)
    ncores = _num_tensorcores()
    B8 = _round_up(B, 8)
    bm = min(block_b, _round_up(-(-B8 // ncores), 8))
    B_pad = _round_up(B8, bm)
    grid = B_pad // bm

    # Cheap pad: batch rows to B_pad, features only to the next multiple of 8.
    x_pad = jnp.pad(x.astype(jnp.float32), ((0, B_pad - B), (0, in_rows - F)))

    kernel = functools.partial(
        _qnet_kernel,
        in_rows=in_rows, hid_rows=hid_rows,
        w2_off=in_rows, w3_off=in_rows + hid_rows,
        b_off=in_rows + 2 * hid_rows, out_lanes=out_lanes)

    out = pl.pallas_call(
        kernel,
        out_shape=jax.ShapeDtypeStruct((B_pad, out_lanes), jnp.float32),
        grid_spec=pltpu.PrefetchScalarGridSpec(
            num_scalar_prefetch=0,
            grid=(grid,),
            in_specs=[
                pl.BlockSpec((bm, in_rows), lambda i: (i, 0)),        # x tile
                pl.BlockSpec((slab_rows, LANE), lambda i: (0, 0)),    # params (resident)
            ],
            out_specs=pl.BlockSpec((bm, out_lanes), lambda i: (i, 0)),
        ),
        compiler_params=pltpu.CompilerParams(
            dimension_semantics=("parallel",),   # megacore sharding on v7x
        ),
    )(x_pad, param_slab)

    return out[:B, :output_size]


def init_params(key, input_size, hidden_size, output_size):
    """Deterministic synthetic init mimicking nn.Linear's uniform(-1/sqrt(fan_in), +)."""
    ks = jax.random.split(key, 6)

    def lin(kw, kb, fan_in, fan_out):
        bound = 1.0 / jnp.sqrt(jnp.float32(fan_in))
        # stored as [in, out] (transposed vs. PyTorch's [out, in])
        w = jax.random.uniform(kw, (fan_in, fan_out), jnp.float32, -bound, bound)
        b = jax.random.uniform(kb, (1, fan_out), jnp.float32, -bound, bound)
        return w, b

    w1, b1 = lin(ks[0], ks[1], input_size, hidden_size)
    w2, b2 = lin(ks[2], ks[3], hidden_size, hidden_size)
    w3, b3 = lin(ks[4], ks[5], hidden_size, output_size)
    return {"w1": w1, "b1": b1, "w2": w2, "b2": b2, "w3": w3, "b3": b3}


def reference_forward(x, params):
    h1 = jnp.maximum(x @ params["w1"] + params["b1"], 0.0)
    h2 = jnp.maximum(h1 @ params["w2"] + params["b2"], 0.0)
    return h2 @ params["w3"] + params["b3"]


if __name__ == "__main__":
    # Snake Q-net typical sizes: 11 state features -> 32 hidden -> 3 actions
    input_size, hidden_size, output_size = 11, 32, 3
    batch = 8

    key = jax.random.PRNGKey(0)
    kx, kp = jax.random.split(key)
    x = jax.random.normal(kx, (batch, input_size), jnp.float32)
    params = init_params(kp, input_size, hidden_size, output_size)
    slab = pack_params(params, input_size, hidden_size, output_size)

    out = linear_qnet_forward(x, slab, output_size=output_size)
    out = jax.block_until_ready(out)

    ref = reference_forward(x, params)
    assert out.shape == (batch, output_size)
    assert jnp.allclose(out, ref, atol=1e-5, rtol=1e-5)

    # Larger (replay-buffer / training-style) batch to exercise the batch-tiled
    # parallel grid and padding paths.
    xb = jax.random.normal(jax.random.PRNGKey(1), (1000, input_size), jnp.float32)
    outb = jax.block_until_ready(linear_qnet_forward(xb, slab, output_size=output_size))
    assert outb.shape == (1000, output_size)
    assert jnp.allclose(outb, reference_forward(xb, params), atol=1e-4, rtol=1e-4)

    print("KERNEL_OK")
</pallas_src>

<mosaic_0001>
module attributes {stable_mosaic.version = 11 : i64} {
  func.func @_qnet_kernel(%arg0: i32, %arg1: memref<8x16xf32, #tpu.memory_space<vmem>>, %arg2: memref<88x128xf32, #tpu.memory_space<vmem>>, %arg3: memref<8x8xf32, #tpu.memory_space<vmem>>) attributes {dimension_semantics = [#tpu.dimension_semantics<parallel>], iteration_bounds = array<i64: 1>, scalar_prefetch = 0 : i64, scratch_operands = 0 : i64, tpu.core_type = #tpu.core_type<tc>, window_params = [{transform_indices = @transform_0, window_bounds = array<i64: 8, 16>}, {pipeline_mode = #tpu.pipeline_mode<synchronous>, transform_indices = @transform_1, window_bounds = array<i64: 88, 128>}, {transform_indices = @transform_2, window_bounds = array<i64: 8, 8>}]} {
    %c0 = arith.constant 0 : index
    %c0_0 = arith.constant 0 : index
    %0 = vector.load %arg1[%c0, %c0_0] : memref<8x16xf32, #tpu.memory_space<vmem>>, vector<8x16xf32>
    %c0_1 = arith.constant 0 : index
    %c0_2 = arith.constant 0 : index
    %1 = vector.load %arg2[%c0_1, %c0_2] : memref<88x128xf32, #tpu.memory_space<vmem>>, vector<16x128xf32>
    %c16 = arith.constant 16 : index
    %c0_3 = arith.constant 0 : index
    %2 = vector.load %arg2[%c16, %c0_3] : memref<88x128xf32, #tpu.memory_space<vmem>>, vector<32x128xf32>
    %c48 = arith.constant 48 : index
    %c0_4 = arith.constant 0 : index
    %3 = vector.load %arg2[%c48, %c0_4] : memref<88x128xf32, #tpu.memory_space<vmem>>, vector<32x128xf32>
    %c80 = arith.constant 80 : index
    %c0_5 = arith.constant 0 : index
    %4 = vector.load %arg2[%c80, %c0_5] : memref<88x128xf32, #tpu.memory_space<vmem>>, vector<8x128xf32>
    %5 = vector.extract_strided_slice %4 {offsets = [0, 0], sizes = [1, 128], strides = [1, 1]} : vector<8x128xf32> to vector<1x128xf32>
    %6 = vector.extract_strided_slice %4 {offsets = [1, 0], sizes = [1, 128], strides = [1, 1]} : vector<8x128xf32> to vector<1x128xf32>
    %7 = vector.extract_strided_slice %4 {offsets = [2, 0], sizes = [1, 128], strides = [1, 1]} : vector<8x128xf32> to vector<1x128xf32>
    %cst = arith.constant dense<0.000000e+00> : vector<8x128xf32>
    %8 = tpu.matmul %0, %1, %cst {dimension_numbers = #tpu.dot_dimension_numbers<[1], [0], [0], [1], [0, 0, 1, 1], [], []>} : vector<8x16xf32>, vector<16x128xf32>, vector<8x128xf32> -> vector<8x128xf32>
    %9 = vector.broadcast %5 : vector<1x128xf32> to vector<8x128xf32>
    %10 = arith.addf %8, %9 : vector<8x128xf32>
    %cst_6 = arith.constant 0.000000e+00 : f32
    %11 = vector.broadcast %cst_6 : f32 to vector<8x128xf32>
    %12 = arith.maximumf %10, %11 : vector<8x128xf32>
    %13 = vector.extract_strided_slice %12 {offsets = [0, 0], sizes = [8, 32], strides = [1, 1]} : vector<8x128xf32> to vector<8x32xf32>
    %cst_7 = arith.constant dense<0.000000e+00> : vector<8x128xf32>
    %14 = tpu.matmul %13, %2, %cst_7 {dimension_numbers = #tpu.dot_dimension_numbers<[1], [0], [0], [1], [0, 0, 1, 1], [], []>} : vector<8x32xf32>, vector<32x128xf32>, vector<8x128xf32> -> vector<8x128xf32>
    %15 = vector.broadcast %6 : vector<1x128xf32> to vector<8x128xf32>
    %16 = arith.addf %14, %15 : vector<8x128xf32>
    %cst_8 = arith.constant 0.000000e+00 : f32
    %17 = vector.broadcast %cst_8 : f32 to vector<8x128xf32>
    %18 = arith.maximumf %16, %17 : vector<8x128xf32>
    %19 = vector.extract_strided_slice %18 {offsets = [0, 0], sizes = [8, 32], strides = [1, 1]} : vector<8x128xf32> to vector<8x32xf32>
    %cst_9 = arith.constant dense<0.000000e+00> : vector<8x128xf32>
    %20 = tpu.matmul %19, %3, %cst_9 {dimension_numbers = #tpu.dot_dimension_numbers<[1], [0], [0], [1], [0, 0, 1, 1], [], []>} : vector<8x32xf32>, vector<32x128xf32>, vector<8x128xf32> -> vector<8x128xf32>
    %21 = vector.broadcast %7 : vector<1x128xf32> to vector<8x128xf32>
    %22 = arith.addf %20, %21 : vector<8x128xf32>
    %23 = vector.extract_strided_slice %22 {offsets = [0, 0], sizes = [8, 8], strides = [1, 1]} : vector<8x128xf32> to vector<8x8xf32>
    %c0_10 = arith.constant 0 : index
    %c0_11 = arith.constant 0 : index
    %24 = vector.load %arg3[%c0_10, %c0_11] : memref<8x8xf32, #tpu.memory_space<vmem>>, vector<8x8xf32>
    tpu.vector_store %arg3[%c0_10, %c0_11], %23 {strides = array<i32>} : memref<8x8xf32, #tpu.memory_space<vmem>>, vector<8x8xf32>,
    return
  }
  func.func @transform_0(%arg0: i32) -> (i32, i32) {
    %c0_i32 = arith.constant 0 : i32
    %c0_i32_0 = arith.constant 0 : i32
    return %arg0, %c0_i32 : i32, i32
  }
  func.func @transform_1(%arg0: i32) -> (i32, i32) {
    %c0_i32 = arith.constant 0 : i32
    %c0_i32_0 = arith.constant 0 : i32
    %c0_i32_1 = arith.constant 0 : i32
    return %c0_i32, %c0_i32_0 : i32, i32
  }
  func.func @transform_2(%arg0: i32) -> (i32, i32) {
    %c0_i32 = arith.constant 0 : i32
    %c0_i32_0 = arith.constant 0 : i32
    return %arg0, %c0_i32 : i32, i32
  }
}

</mosaic_0001>

<llo_original>
// kernel: linear_qnet_forward.1
$region0: #{linear_qnet_forward.1}
  #allocation0 [shape = 'u32[]', space=smem, size = 0x4, offset = 0x4, fixed_abs, tag = 'smem constant byte address 0x4 - core index']
  #allocation1 [shape = 'u32[144,128]{1,0:T(1,128)}', space=vmem, size = 0x12000, scoped, tag = 'internal scratch']
  %s0 = inlined_call_operand.vmem [shape: f32[8,16], index: 0, kind: input, shape index: {}]
  %s1 = inlined_call_operand.hbm [shape: f32[88,128], index: 1, kind: input, shape index: {}]
  %s2 = inlined_call_operand.vmem [shape: f32[8,8], index: 2, kind: output, shape index: {}]
  %s3 = sld [smem:[#allocation0]]
  $region22: #{linear_qnet_forward.1} parent=0
    _
  %s5 = ssub.s32 1, %s3
  %s6 = scalar_select 0, %s5, %s3
  $region1: #{linear_qnet_forward.1} parent=0
    #allocation2 [shape = 'u8[45056]{0}', space=vmem, size = 0xb000, scoped, tag = 'input window, operand 1, single buffered']
    #allocation3 [shape = 's32[1]{0}', space=sflag, size = 0x4, scoped, tag = 'scoped memory for linear_qnet_forward.1']
    %7 = vsyncpa [#allocation3], 0
    // Predicated region
    $region2: #{linear_qnet_forward.1} parent=1 // pred_check
      _
    $region3: #{linear_qnet_forward.1} parent=1 // pred_check_branch
      %9 = sbr.rel (0) target = $region5
    $region4: #{linear_qnet_forward.1} parent=1 // pred_region
      _
    $region5: #{linear_qnet_forward.1} parent=1 // pred_fallthru
      _
    // Predicated region
    $region6: #{linear_qnet_forward.1} parent=1 // pred_check
      _
    $region7: #{linear_qnet_forward.1} parent=1 // pred_check_branch
      %11 = sbr.rel (0) target = $region9
    $region8: #{linear_qnet_forward.1} parent=1 // pred_region
      %s13 = ssub.s32 1408, 1408
      %14 = vsyncadd [#allocation3], %s13
      %s15 = sshll.u32 [#allocation2], 4
      %s16 = int_to_ptr.vmem [resolvable:$true] %s15
      %21 = dma.hbm_to_vmem [thread:$0]  %s1, 1408, %s16, [#allocation3], 128, 128, 8
    $region9: #{linear_qnet_forward.1} parent=1 // pred_fallthru
      _
    // Predicated region
    $region10: #{linear_qnet_forward.1} parent=1 // pred_check
      _
    $region11: #{linear_qnet_forward.1} parent=1 // pred_check_branch
      %23 = sbr.rel (0) target = $region13
    $region12: #{linear_qnet_forward.1} parent=1 // pred_region
      %24 = dma.done [#allocation3], 1408
    $region13: #{linear_qnet_forward.1} parent=1 // pred_fallthru
      _
    %v25 = vld [vmem:[%s0] sm:$0xff]
    %v26 = vld [vmem:[#allocation2] sm:$0xff]
    %v27 = vld [vmem:[#allocation2 + $0x8] sm:$0xff]
    %v28 = vld [vmem:[#allocation2 + $0x10] sm:$0xff]
    %v29 = vld [vmem:[#allocation2 + $0x18] sm:$0xff]
    %v30 = vld [vmem:[#allocation2 + $0x20] sm:$0xff]
    %v31 = vld [vmem:[#allocation2 + $0x28] sm:$0xff]
    %v32 = vld [vmem:[#allocation2 + $0x30] sm:$0xff]
    %v33 = vld [vmem:[#allocation2 + $0x38] sm:$0xff]
    %v34 = vld [vmem:[#allocation2 + $0x40] sm:$0xff]
    %v35 = vld [vmem:[#allocation2 + $0x48] sm:$0xff]
    %v36 = vld [vmem:[#allocation2 + $0x50] sm:$0xff]
    %v37 = vlaneseq
    %v38 = vshrl.u32 %v37, 7
    %v39 = vsub.s32 0, %v38
    %v40 = vrot.slane %v36, %v39
    %vm41 = vcmask 130048
    %v43 = vsel %vm41, %v25, 0
    %45 = vmatprep.subr.mxu0 0.0
    %46 = vmatpush1.msra.mxu0 %v26
    %47 = vmatprep.subr.mxu0 0.0
    %48 = vmatpush1.msra.mxu0 %v27
    %49 = vmatprep.subr.mxu0 0.0
    %50 = vmatpush1.msra.mxu0 0.0
    %51 = vmatprep.subr.mxu0 0.0
    %52 = vmatpush1.msra.mxu0 0.0
    %53 = vmatprep.subr.mxu0 0.0
    %54 = vmatpush1.msra.mxu0 0.0
    %55 = vmatprep.subr.mxu0 0.0
    %56 = vmatpush1.msra.mxu0 0.0
    %57 = vmatprep.subr.mxu0 0.0
    %58 = vmatpush1.msra.mxu0 0.0
    %59 = vmatprep.subr.mxu0 0.0
    %60 = vmatpush1.msra.mxu0 0.0
    %61 = vmatprep.subr.mxu0 0.0
    %62 = vmatpush1.msra.mxu0 0.0
    %63 = vmatprep.subr.mxu0 0.0
    %64 = vmatpush1.msra.mxu0 0.0
    %65 = vmatprep.subr.mxu0 0.0
    %66 = vmatpush1.msra.mxu0 0.0
    %67 = vmatprep.subr.mxu0 0.0
    %68 = vmatpush1.msra.mxu0 0.0
    %69 = vmatprep.subr.mxu0 0.0
    %70 = vmatpush1.msra.mxu0 0.0
    %71 = vmatprep.subr.mxu0 0.0
    %72 = vmatpush1.msra.mxu0 0.0
    %73 = vmatprep.subr.mxu0 0.0
    %74 = vmatpush1.msra.mxu0 0.0
    %75 = vmatprep.subr.mxu0 0.0
    %76 = vmatpush1.msra.mxu0 0.0
    %77 = vmatprep.subr.mxu0 0.0
    %78 = vmatpush1.msra.mxu0 0.0
    %79 = vmatprep.subr.mxu0 0.0
    %80 = vmatpush1.msra.mxu0 0.0
    %81 = vmatprep.subr.mxu0 0.0
    %82 = vmatpush1.msra.mxu0 0.0
    %83 = vmatprep.subr.mxu0 0.0
    %84 = vmatpush1.msra.mxu0 0.0
    %85 = vmatprep.subr.mxu0 0.0
    %86 = vmatpush1.msra.mxu0 0.0
    %87 = vmatprep.subr.mxu0 0.0
    %88 = vmatpush1.msra.mxu0 0.0
    %89 = vmatprep.subr.mxu0 0.0
    %90 = vmatpush1.msra.mxu0 0.0
    %91 = vmatprep.subr.mxu0 0.0
    %92 = vmatpush1.msra.mxu0 0.0
    %93 = vmatprep.subr.mxu0 0.0
    %94 = vmatpush1.msra.mxu0 0.0
    %95 = vmatprep.subr.mxu0 0.0
    %96 = vmatpush1.msra.mxu0 0.0
    %97 = vmatprep.subr.mxu0 0.0
    %98 = vmatpush1.msra.mxu0 0.0
    %99 = vmatprep.subr.mxu0 0.0
    %100 = vmatpush1.msra.mxu0 0.0
    %101 = vmatprep.subr.mxu0 0.0
    %102 = vmatpush1.msra.mxu0 0.0
    %103 = vmatprep.subr.mxu0 0.0
    %104 = vmatpush1.msra.mxu0 0.0
    %105 = vmatprep.subr.mxu0 0.0
    %106 = vmatpush1.msra.mxu0 0.0
    %107 = vmatprep.subr.mxu0 0.0
    %108 = vmatpush1.msra.mxu0 0.0
    %109 = vmatprep.mubr.f32.mxu0 0.0
    %110 = vmatmul.mubr.f32.gmra.mrb[0].mxu0 %v43
    %v111 = vpop.f32.mrb[0].mxu0
    %v112 = vadd.f32 %v40, %v111
    %v113 = vpop.f32.mrb[0].mxu0
    %114 = vdwg.mxu0
    %v115 = vmax.f32 %v112, 0.0
    %v116 = vlaneseq
    %v117 = vshrl.u32 %v116, 7
    %v118 = vsub.s32 1, %v117
    %v119 = vrot.slane %v36, %v118
    %vm120 = vcmask 261120
    %v122 = vsel %vm120, %v115, 0
    %124 = vmatprep.subr.mxu0 0.0
    %125 = vmatpush1.msra.mxu0 %v28
    %126 = vmatprep.subr.mxu0 0.0
    %127 = vmatpush1.msra.mxu0 %v29
    %128 = vmatprep.subr.mxu0 0.0
    %129 = vmatpush1.msra.mxu0 %v30
    %130 = vmatprep.subr.mxu0 0.0
    %131 = vmatpush1.msra.mxu0 %v31
    %132 = vmatprep.subr.mxu0 0.0
    %133 = vmatpush1.msra.mxu0 0.0
    %134 = vmatprep.subr.mxu0 0.0
    %135 = vmatpush1.msra.mxu0 0.0
    %136 = vmatprep.subr.mxu0 0.0
    %137 = vmatpush1.msra.mxu0 0.0
    %138 = vmatprep.subr.mxu0 0.0
    %139 = vmatpush1.msra.mxu0 0.0
    %140 = vmatprep.subr.mxu0 0.0
    %141 = vmatpush1.msra.mxu0 0.0
    %142 = vmatprep.subr.mxu0 0.0
    %143 = vmatpush1.msra.mxu0 0.0
    %144 = vmatprep.subr.mxu0 0.0
    %145 = vmatpush1.msra.mxu0 0.0
    %146 = vmatprep.subr.mxu0 0.0
    %147 = vmatpush1.msra.mxu0 0.0
    %148 = vmatprep.subr.mxu0 0.0
    %149 = vmatpush1.msra.mxu0 0.0
    %150 = vmatprep.subr.mxu0 0.0
    %151 = vmatpush1.msra.mxu0 0.0
    %152 = vmatprep.subr.mxu0 0.0
    %153 = vmatpush1.msra.mxu0 0.0
    %154 = vmatprep.subr.mxu0 0.0
    %155 = vmatpush1.msra.mxu0 0.0
    %156 = vmatprep.subr.mxu0 0.0
    %157 = vmatpush1.msra.mxu0 0.0
    %158 = vmatprep.subr.mxu0 0.0
    %159 = vmatpush1.msra.mxu0 0.0
    %160 = vmatprep.subr.mxu0 0.0
    %161 = vmatpush1.msra.mxu0 0.0
    %162 = vmatprep.subr.mxu0 0.0
    %163 = vmatpush1.msra.mxu0 0.0
    %164 = vmatprep.subr.mxu0 0.0
    %165 = vmatpush1.msra.mxu0 0.0
    %166 = vmatprep.subr.mxu0 0.0
    %167 = vmatpush1.msra.mxu0 0.0
    %168 = vmatprep.subr.mxu0 0.0
    %169 = vmatpush1.msra.mxu0 0.0
    %170 = vmatprep.subr.mxu0 0.0
    %171 = vmatpush1.msra.mxu0 0.0
    %172 = vmatprep.subr.mxu0 0.0
    %173 = vmatpush1.msra.mxu0 0.0
    %174 = vmatprep.subr.mxu0 0.0
    %175 = vmatpush1.msra.mxu0 0.0
    %176 = vmatprep.subr.mxu0 0.0
    %177 = vmatpush1.msra.mxu0 0.0
    %178 = vmatprep.subr.mxu0 0.0
    %179 = vmatpush1.msra.mxu0 0.0
    %180 = vmatprep.subr.mxu0 0.0
    %181 = vmatpush1.msra.mxu0 0.0
    %182 = vmatprep.subr.mxu0 0.0
    %183 = vmatpush1.msra.mxu0 0.0
    %184 = vmatprep.subr.mxu0 0.0
    %185 = vmatpush1.msra.mxu0 0.0
    %186 = vmatprep.subr.mxu0 0.0
    %187 = vmatpush1.msra.mxu0 0.0
    %188 = vmatprep.mubr.f32.mxu0 0.0
    %189 = vmatmul.mubr.f32.gmra.mrb[0].mxu0 %v122
    %v190 = vpop.f32.mrb[0].mxu0
    %v191 = vadd.f32 %v119, %v190
    %v192 = vpop.f32.mrb[0].mxu0
    %193 = vdwg.mxu0
    %v194 = vmax.f32 %v191, 0.0
    %v195 = vlaneseq
    %v196 = vshrl.u32 %v195, 7
    %v197 = vsub.s32 2, %v196
    %v198 = vrot.slane %v36, %v197
    %v200 = vsel %vm120, %v194, 0
    %202 = vmatprep.subr.mxu0 0.0
    %203 = vmatpush1.msra.mxu0 %v32
    %204 = vmatprep.subr.mxu0 0.0
    %205 = vmatpush1.msra.mxu0 %v33
    %206 = vmatprep.subr.mxu0 0.0
    %207 = vmatpush1.msra.mxu0 %v34
    %208 = vmatprep.subr.mxu0 0.0
    %209 = vmatpush1.msra.mxu0 %v35
    %210 = vmatprep.subr.mxu0 0.0
    %211 = vmatpush1.msra.mxu0 0.0
    %212 = vmatprep.subr.mxu0 0.0
    %213 = vmatpush1.msra.mxu0 0.0
    %214 = vmatprep.subr.mxu0 0.0
    %215 = vmatpush1.msra.mxu0 0.0
    %216 = vmatprep.subr.mxu0 0.0
    %217 = vmatpush1.msra.mxu0 0.0
    %218 = vmatprep.subr.mxu0 0.0
    %219 = vmatpush1.msra.mxu0 0.0
    %220 = vmatprep.subr.mxu0 0.0
    %221 = vmatpush1.msra.mxu0 0.0
    %222 = vmatprep.subr.mxu0 0.0
    %223 = vmatpush1.msra.mxu0 0.0
    %224 = vmatprep.subr.mxu0 0.0
    %225 = vmatpush1.msra.mxu0 0.0
    %226 = vmatprep.subr.mxu0 0.0
    %227 = vmatpush1.msra.mxu0 0.0
    %228 = vmatprep.subr.mxu0 0.0
    %229 = vmatpush1.msra.mxu0 0.0
    %230 = vmatprep.subr.mxu0 0.0
    %231 = vmatpush1.msra.mxu0 0.0
    %232 = vmatprep.subr.mxu0 0.0
    %233 = vmatpush1.msra.mxu0 0.0
    %234 = vmatprep.subr.mxu0 0.0
    %235 = vmatpush1.msra.mxu0 0.0
    %236 = vmatprep.subr.mxu0 0.0
    %237 = vmatpush1.msra.mxu0 0.0
    %238 = vmatprep.subr.mxu0 0.0
    %239 = vmatpush1.msra.mxu0 0.0
    %240 = vmatprep.subr.mxu0 0.0
    %241 = vmatpush1.msra.mxu0 0.0
    %242 = vmatprep.subr.mxu0 0.0
    %243 = vmatpush1.msra.mxu0 0.0
    %244 = vmatprep.subr.mxu0 0.0
    %245 = vmatpush1.msra.mxu0 0.0
    %246 = vmatprep.subr.mxu0 0.0
    %247 = vmatpush1.msra.mxu0 0.0
    %248 = vmatprep.subr.mxu0 0.0
    %249 = vmatpush1.msra.mxu0 0.0
    %250 = vmatprep.subr.mxu0 0.0
    %251 = vmatpush1.msra.mxu0 0.0
    %252 = vmatprep.subr.mxu0 0.0
    %253 = vmatpush1.msra.mxu0 0.0
    %254 = vmatprep.subr.mxu0 0.0
    %255 = vmatpush1.msra.mxu0 0.0
    %256 = vmatprep.subr.mxu0 0.0
    %257 = vmatpush1.msra.mxu0 0.0
    %258 = vmatprep.subr.mxu0 0.0
    %259 = vmatpush1.msra.mxu0 0.0
    %260 = vmatprep.subr.mxu0 0.0
    %261 = vmatpush1.msra.mxu0 0.0
    %262 = vmatprep.subr.mxu0 0.0
    %263 = vmatpush1.msra.mxu0 0.0
    %264 = vmatprep.subr.mxu0 0.0
    %265 = vmatpush1.msra.mxu0 0.0
    %266 = vmatprep.mubr.f32.mxu0 0.0
    %267 = vmatmul.mubr.f32.gmra.mrb[0].mxu0 %v200
    %v268 = vpop.f32.mrb[0].mxu0
    %v269 = vadd.f32 %v198, %v268
    %v270 = vpop.f32.mrb[0].mxu0
    %271 = vdwg.mxu0
    %vm272 = vcmask 64512
    %273 = vst.msk [vmem:[%s2] sm:$0xff] %vm272, %v269
    // Predicated region
    $region14: #{linear_qnet_forward.1} parent=1 // pred_check
      _
    $region15: #{linear_qnet_forward.1} parent=1 // pred_check_branch
      %275 = sbr.rel (0) target = $region17
    $region16: #{linear_qnet_forward.1} parent=1 // pred_region
      _
    $region17: #{linear_qnet_forward.1} parent=1 // pred_fallthru
      _
    // Predicated region
    $region18: #{linear_qnet_forward.1} parent=1 // pred_check
      _
    $region19: #{linear_qnet_forward.1} parent=1 // pred_check_branch
      %277 = sbr.rel (0) target = $region21
    $region20: #{linear_qnet_forward.1} parent=1 // pred_region
      _
    $region21: #{linear_qnet_forward.1} parent=1 // pred_fallthru
      _
    %278 = vsyncpa [#allocation3], 1

</llo_original>
